<compile_context>
chip_gen: v7x
topology: tpu7x:2x2x1
jax: 0.10.0
libtpu: 0.0.40
codegen_flags: <defaults>
</compile_context>

<pallas_src>
import functools

import jax
import jax.numpy as jnp
import numpy as np
from jax.experimental import pallas as pl
from jax.experimental.pallas import tpu as pltpu

_LANES = 128
_SUBLANES = 8


def _iou_partial_kernel(x_ref, t_ref, out_ref, acc_ref, *, apply_sigmoid):
    """Reduce (tr, 128) tiles into a (3, 8, 128) VMEM vector accumulator.

    acc_ref[0] = sum(score * target)
    acc_ref[1] = sum(target * target)
    acc_ref[2] = sum(score * score)

    Per grid step each (tr, 128) tile is only folded down to (8, 128)
    (elementwise vreg adds, no cross-lane work); the single cross-sublane
    reduce happens in the finalize branch, which writes lane-dense (3, 128)
    partial sums for this core's split.
    """
    i = pl.program_id(1)

    @pl.when(i == 0)
    def _init():
        acc_ref[...] = jnp.zeros_like(acc_ref)

    x = x_ref[...]
    if apply_sigmoid:
        x = jax.nn.sigmoid(x)          # EUP slot; effectively free
    t = t_ref[...]

    g = x_ref.shape[0] // _SUBLANES
    acc_ref[0] += (x * t).reshape(g, _SUBLANES, _LANES).sum(axis=0)
    acc_ref[1] += (t * t).reshape(g, _SUBLANES, _LANES).sum(axis=0)
    acc_ref[2] += (x * x).reshape(g, _SUBLANES, _LANES).sum(axis=0)

    @pl.when(i == pl.num_programs(1) - 1)
    def _finalize():
        out_ref[0] = jnp.sum(acc_ref[...], axis=1)      # (3, 128), lane-dense


def iou_loss_binary(inputs, target, weight, sigmoid=True, *,
                    tile_rows=1024, num_splits=2):
    """Pallas TPU implementation of IoULoss_Binary.forward."""
    assert inputs.shape == target.shape, (
        f"predict {inputs.shape} & target {target.shape} shape do not match")

    # Channel 0 only (matches inputs[:, 0] / target[:, 0] in the reference).
    x = inputs[:, 0].reshape(-1).astype(jnp.float32)
    t = target[:, 0].reshape(-1).astype(jnp.float32)
    n = x.shape[0]

    rows = pl.cdiv(n, _LANES)
    rows8 = pl.cdiv(rows, _SUBLANES) * _SUBLANES       # multiple of 8
    tr = min(int(tile_rows), int(rows8))               # row-tile (multiple of 8)
    chunk = tr * num_splits
    rows_pad = pl.cdiv(rows, chunk) * chunk
    tiles_per_split = rows_pad // chunk
    pad = rows_pad * _LANES - n

    # Pad logits with a large negative so sigmoid(pad) ~= 0 and contributes
    # ~0 to every sum; with sigmoid=False zero-padding contributes exactly 0.
    # No mask stream and no in-kernel masking needed.
    x_pad_val = -30.0 if sigmoid else 0.0
    x2 = jnp.pad(x, (0, pad), constant_values=x_pad_val).reshape(rows_pad, _LANES)
    t2 = jnp.pad(t, (0, pad)).reshape(rows_pad, _LANES)

    kernel = functools.partial(_iou_partial_kernel, apply_sigmoid=bool(sigmoid))

    partials = pl.pallas_call(
        kernel,
        out_shape=jax.ShapeDtypeStruct((num_splits, 3, _LANES), jnp.float32),
        grid_spec=pltpu.PrefetchScalarGridSpec(
            num_scalar_prefetch=0,
            grid=(num_splits, tiles_per_split),
            in_specs=[
                pl.BlockSpec((tr, _LANES),
                             lambda c, i: (c * tiles_per_split + i, 0)),
                pl.BlockSpec((tr, _LANES),
                             lambda c, i: (c * tiles_per_split + i, 0)),
            ],
            out_specs=pl.BlockSpec((1, 3, _LANES), lambda c, i: (c, 0, 0)),
            scratch_shapes=[pltpu.VMEM((3, _SUBLANES, _LANES), jnp.float32)],
        ),
        compiler_params=pltpu.CompilerParams(
            dimension_semantics=("parallel", "arbitrary")),
    )(x2, t2)

    # Combine per-core partials and finish the (trivial) scalar IoU math.
    sums = jnp.sum(partials, axis=(0, 2))               # (3,)
    intersect, y_sum, z_sum = sums[0], sums[1], sums[2]
    smooth = jnp.float32(1.0)
    iou = (intersect + smooth) / (z_sum + y_sum - intersect + smooth)
    loss = (jnp.float32(1.0) - iou) * jnp.asarray(weight, jnp.float32)
    return loss


def _reference(inputs, target, weight, sigmoid=True):
    s = jax.nn.sigmoid(inputs) if sigmoid else inputs
    s = s[:, 0].astype(jnp.float32)
    t = target[:, 0].astype(jnp.float32)
    smooth = 1.0
    intersect = jnp.sum(s * t)
    y_sum = jnp.sum(t * t)
    z_sum = jnp.sum(s * s)
    loss = 1.0 - (intersect + smooth) / (z_sum + y_sum - intersect + smooth)
    return loss * weight


if __name__ == "__main__":
    key = jax.random.PRNGKey(0)
    k1, k2 = jax.random.split(key)

    B, C, H, W = 2, 4, 16, 16
    inputs = jax.random.normal(k1, (B, C, H, W), dtype=jnp.float32)
    # Binary target (0/1), same shape as inputs.
    target = (jax.random.uniform(k2, (B, C, H, W)) > 0.5).astype(jnp.float32)
    weight = 0.7

    # sigmoid=True path
    loss = jax.block_until_ready(iou_loss_binary(inputs, target, weight, sigmoid=True))
    ref = jax.block_until_ready(_reference(inputs, target, weight, sigmoid=True))
    assert np.allclose(np.asarray(loss), np.asarray(ref), rtol=1e-5, atol=1e-5), (
        f"pallas={loss} ref={ref}")

    # sigmoid=False path (zero padding)
    probs = jax.nn.sigmoid(inputs)
    loss2 = jax.block_until_ready(iou_loss_binary(probs, target, weight, sigmoid=False))
    ref2 = jax.block_until_ready(_reference(probs, target, weight, sigmoid=False))
    assert np.allclose(np.asarray(loss2), np.asarray(ref2), rtol=1e-5, atol=1e-5), (
        f"pallas={loss2} ref={ref2}")

    print("KERNEL_OK")
</pallas_src>

<mosaic_0001>
module attributes {stable_mosaic.version = 11 : i64} {
  func.func @_iou_partial_kernel(%arg0: i32, %arg1: i32, %arg2: memref<8x128xf32, #tpu.memory_space<vmem>>, %arg3: memref<8x128xf32, #tpu.memory_space<vmem>>, %arg4: memref<1x3x128xf32, #tpu.memory_space<vmem>>, %arg5: memref<3x8x128xf32, #tpu.memory_space<vmem>>) attributes {dimension_semantics = [#tpu.dimension_semantics<parallel>, #tpu.dimension_semantics<arbitrary>], iteration_bounds = array<i64: 2, 1>, scalar_prefetch = 0 : i64, scratch_operands = 1 : i64, tpu.core_type = #tpu.core_type<tc>, window_params = [{transform_indices = @transform_0, window_bounds = array<i64: 8, 128>}, {transform_indices = @transform_1, window_bounds = array<i64: 8, 128>}, {transform_indices = @transform_2, window_bounds = array<i64: 1, 3, 128>}]} {
    %c0_i32 = arith.constant 0 : i32
    %0 = arith.cmpi eq, %arg1, %c0_i32 : i32
    %1 = arith.extui %0 : i1 to i32
    %c0_i32_0 = arith.constant 0 : i32
    %2 = arith.cmpi ne, %1, %c0_i32_0 : i32
    scf.if %2 {
      %cst_25 = arith.constant 0.000000e+00 : f32
      %40 = vector.broadcast %cst_25 : f32 to vector<3x8x128xf32>
      %c0_26 = arith.constant 0 : index
      %c0_27 = arith.constant 0 : index
      %c0_28 = arith.constant 0 : index
      %41 = vector.load %arg5[%c0_26, %c0_27, %c0_28] : memref<3x8x128xf32, #tpu.memory_space<vmem>>, vector<3x8x128xf32>
      tpu.vector_store %arg5[%c0_26, %c0_27, %c0_28], %40 {strides = array<i32>} : memref<3x8x128xf32, #tpu.memory_space<vmem>>, vector<3x8x128xf32>,
    } else {
    }
    %c0 = arith.constant 0 : index
    %c0_1 = arith.constant 0 : index
    %3 = vector.load %arg2[%c0, %c0_1] : memref<8x128xf32, #tpu.memory_space<vmem>>, vector<8x128xf32>
    %4 = arith.negf %3 : vector<8x128xf32>
    %5 = math.exp %4 : vector<8x128xf32>
    %cst = arith.constant 1.000000e+00 : f32
    %6 = vector.broadcast %cst : f32 to vector<8x128xf32>
    %7 = arith.addf %6, %5 : vector<8x128xf32>
    %8 = arith.divf %6, %7 : vector<8x128xf32>
    %c0_2 = arith.constant 0 : index
    %c0_3 = arith.constant 0 : index
    %9 = vector.load %arg3[%c0_2, %c0_3] : memref<8x128xf32, #tpu.memory_space<vmem>>, vector<8x128xf32>
    %c0_4 = arith.constant 0 : index
    %c0_5 = arith.constant 0 : index
    %c0_6 = arith.constant 0 : index
    %10 = vector.load %arg5[%c0_4, %c0_5, %c0_6] : memref<3x8x128xf32, #tpu.memory_space<vmem>>, vector<1x8x128xf32>
    %11 = vector.shape_cast %10 : vector<1x8x128xf32> to vector<8x128xf32>
    %12 = arith.mulf %8, %9 : vector<8x128xf32>
    %13 = vector.shape_cast %12 : vector<8x128xf32> to vector<1x8x128xf32>
    %cst_7 = arith.constant dense<0.000000e+00> : vector<8x128xf32>
    %14 = vector.multi_reduction <add>, %13, %cst_7 [0] : vector<1x8x128xf32> to vector<8x128xf32>
    %15 = arith.addf %11, %14 : vector<8x128xf32>
    %c0_8 = arith.constant 0 : index
    %c0_9 = arith.constant 0 : index
    %c0_10 = arith.constant 0 : index
    %16 = vector.load %arg5[%c0_8, %c0_9, %c0_10] : memref<3x8x128xf32, #tpu.memory_space<vmem>>, vector<1x8x128xf32>
    %17 = vector.shape_cast %16 : vector<1x8x128xf32> to vector<8x128xf32>
    %18 = vector.shape_cast %15 : vector<8x128xf32> to vector<1x8x128xf32>
    tpu.vector_store %arg5[%c0_8, %c0_9, %c0_10], %18 {strides = array<i32>} : memref<3x8x128xf32, #tpu.memory_space<vmem>>, vector<1x8x128xf32>,
    %c1 = arith.constant 1 : index
    %c0_11 = arith.constant 0 : index
    %c0_12 = arith.constant 0 : index
    %19 = vector.load %arg5[%c1, %c0_11, %c0_12] : memref<3x8x128xf32, #tpu.memory_space<vmem>>, vector<1x8x128xf32>
    %20 = vector.shape_cast %19 : vector<1x8x128xf32> to vector<8x128xf32>
    %21 = arith.mulf %9, %9 : vector<8x128xf32>
    %22 = vector.shape_cast %21 : vector<8x128xf32> to vector<1x8x128xf32>
    %cst_13 = arith.constant dense<0.000000e+00> : vector<8x128xf32>
    %23 = vector.multi_reduction <add>, %22, %cst_13 [0] : vector<1x8x128xf32> to vector<8x128xf32>
    %24 = arith.addf %20, %23 : vector<8x128xf32>
    %c1_14 = arith.constant 1 : index
    %c0_15 = arith.constant 0 : index
    %c0_16 = arith.constant 0 : index
    %25 = vector.load %arg5[%c1_14, %c0_15, %c0_16] : memref<3x8x128xf32, #tpu.memory_space<vmem>>, vector<1x8x128xf32>
    %26 = vector.shape_cast %25 : vector<1x8x128xf32> to vector<8x128xf32>
    %27 = vector.shape_cast %24 : vector<8x128xf32> to vector<1x8x128xf32>
    tpu.vector_store %arg5[%c1_14, %c0_15, %c0_16], %27 {strides = array<i32>} : memref<3x8x128xf32, #tpu.memory_space<vmem>>, vector<1x8x128xf32>,
    %c2 = arith.constant 2 : index
    %c0_17 = arith.constant 0 : index
    %c0_18 = arith.constant 0 : index
    %28 = vector.load %arg5[%c2, %c0_17, %c0_18] : memref<3x8x128xf32, #tpu.memory_space<vmem>>, vector<1x8x128xf32>
    %29 = vector.shape_cast %28 : vector<1x8x128xf32> to vector<8x128xf32>
    %30 = arith.mulf %8, %8 : vector<8x128xf32>
    %31 = vector.shape_cast %30 : vector<8x128xf32> to vector<1x8x128xf32>
    %cst_19 = arith.constant dense<0.000000e+00> : vector<8x128xf32>
    %32 = vector.multi_reduction <add>, %31, %cst_19 [0] : vector<1x8x128xf32> to vector<8x128xf32>
    %33 = arith.addf %29, %32 : vector<8x128xf32>
    %c2_20 = arith.constant 2 : index
    %c0_21 = arith.constant 0 : index
    %c0_22 = arith.constant 0 : index
    %34 = vector.load %arg5[%c2_20, %c0_21, %c0_22] : memref<3x8x128xf32, #tpu.memory_space<vmem>>, vector<1x8x128xf32>
    %35 = vector.shape_cast %34 : vector<1x8x128xf32> to vector<8x128xf32>
    %36 = vector.shape_cast %33 : vector<8x128xf32> to vector<1x8x128xf32>
    tpu.vector_store %arg5[%c2_20, %c0_21, %c0_22], %36 {strides = array<i32>} : memref<3x8x128xf32, #tpu.memory_space<vmem>>, vector<1x8x128xf32>,
    %c0_i32_23 = arith.constant 0 : i32
    %37 = arith.cmpi eq, %arg1, %c0_i32_23 : i32
    %38 = arith.extui %37 : i1 to i32
    %c0_i32_24 = arith.constant 0 : i32
    %39 = arith.cmpi ne, %38, %c0_i32_24 : i32
    scf.if %39 {
      %c0_25 = arith.constant 0 : index
      %c0_26 = arith.constant 0 : index
      %c0_27 = arith.constant 0 : index
      %40 = vector.load %arg5[%c0_25, %c0_26, %c0_27] : memref<3x8x128xf32, #tpu.memory_space<vmem>>, vector<3x8x128xf32>
      %cst_28 = arith.constant dense<0.000000e+00> : vector<3x128xf32>
      %41 = vector.multi_reduction <add>, %40, %cst_28 [1] : vector<3x8x128xf32> to vector<3x128xf32>
      %c0_29 = arith.constant 0 : index
      %c0_30 = arith.constant 0 : index
      %c0_31 = arith.constant 0 : index
      %42 = vector.load %arg4[%c0_29, %c0_30, %c0_31] : memref<1x3x128xf32, #tpu.memory_space<vmem>>, vector<1x3x128xf32>
      %43 = vector.shape_cast %42 : vector<1x3x128xf32> to vector<3x128xf32>
      %44 = vector.shape_cast %41 : vector<3x128xf32> to vector<1x3x128xf32>
      tpu.vector_store %arg4[%c0_29, %c0_30, %c0_31], %44 {strides = array<i32>} : memref<1x3x128xf32, #tpu.memory_space<vmem>>, vector<1x3x128xf32>,
    } else {
    }
    return
  }
  func.func @transform_0(%arg0: i32, %arg1: i32) -> (i32, i32) {
    %c1_i32 = arith.constant 1 : i32
    %0 = arith.muli %arg0, %c1_i32 : i32
    %1 = arith.addi %0, %arg1 : i32
    %c0_i32 = arith.constant 0 : i32
    %c0_i32_0 = arith.constant 0 : i32
    return %1, %c0_i32 : i32, i32
  }
  func.func @transform_1(%arg0: i32, %arg1: i32) -> (i32, i32) {
    %c1_i32 = arith.constant 1 : i32
    %0 = arith.muli %arg0, %c1_i32 : i32
    %1 = arith.addi %0, %arg1 : i32
    %c0_i32 = arith.constant 0 : i32
    %c0_i32_0 = arith.constant 0 : i32
    return %1, %c0_i32 : i32, i32
  }
  func.func @transform_2(%arg0: i32, %arg1: i32) -> (i32, i32, i32) {
    %c0_i32 = arith.constant 0 : i32
    %c0_i32_0 = arith.constant 0 : i32
    %c0_i32_1 = arith.constant 0 : i32
    return %arg0, %c0_i32, %c0_i32_0 : i32, i32, i32
  }
}

</mosaic_0001>

<llo_original>
// kernel: tpu_custom_call.1
$region0: #{tpu_custom_call.1}
  #allocation0 [shape = 'u32[]', space=smem, size = 0x4, offset = 0x4, fixed_abs, tag = 'smem constant byte address 0x4 - core index']
  #allocation1 [shape = 'u32[144,128]{1,0:T(1,128)}', space=vmem, size = 0x12000, scoped, tag = 'internal scratch']
  #allocation2 [shape = 'f32[3,8,128]{2,1,0:T(8,128)}', space=vmem, size = 0x3000, scoped, tag = 'scratch operand']
  %s0 = inlined_call_operand.hbm [shape: f32[16,128], index: 0, kind: input, shape index: {}]
  %s1 = inlined_call_operand.hbm [shape: f32[16,128], index: 1, kind: input, shape index: {}]
  %s2 = inlined_call_operand.vmem [shape: f32[2,3,128], index: 2, kind: output, shape index: {}]
  %s3 = sld [smem:[#allocation0]]
  $region57: #{tpu_custom_call.1} parent=0
    _
  %s5 = ssub.s32 1, %s3
  %s6 = scalar_select 0, %s5, %s3
  $region1: #{tpu_custom_call.1} parent=0
    #allocation3 [shape = 'u8[8192]{0}', space=vmem, size = 0x2000, scoped, tag = 'input window, operand 0']
    #allocation4 [shape = 's32[2]{0}', space=sflag, size = 0x8, scoped, tag = 'scoped memory for tpu_custom_call.1']
    #allocation5 [shape = 'u8[8192]{0}', space=vmem, size = 0x2000, scoped, tag = 'input window, operand 1']
    #allocation6 [shape = 's32[2]{0}', space=sflag, size = 0x8, scoped, tag = 'scoped memory for tpu_custom_call.1']
    %7 = vsyncpa [#allocation4], 0
    %s8 = scalar_lea.sflag [#allocation4], 1
    %9 = vsyncpa %s8, 0
    %10 = vsyncpa [#allocation6], 0
    %s11 = scalar_lea.sflag [#allocation6], 1
    %12 = vsyncpa %s11, 0
    loop: start=0, step=1, limit=4
    $region2: #{tpu_custom_call.1} parent=1 // loop_pre_header
      _
    $region3: #{tpu_custom_call.1} parent=1 // loop_header
      %s14 = sphi 0, %s18
      %p15 = scmp.ge.s32.totalorder %s14, 4
      %s21 = sphi 0, %s33
      %s22 = sphi 0, %s29
      %s23 = sphi 0, %s21
      %s24 = sphi 0, %s22
      %s25 = sphi 0, %s23
      %s26 = sphi 0, %s24
      %s38 = sphi 0, %s40
      %s41 = sphi 0, %s38
      %s42 = sphi 0, %s41
      %s58 = sphi 0, %s42
      %s66 = sphi 0, %s68
      %s69 = sphi 0, %s66
      %s70 = sphi 0, %s69
      %s86 = sphi 0, %s70
      %s92 = sphi 0, %s94
      %s95 = sphi 0, %s92
      %s96 = sphi 0, %s95
      %s112 = sphi 0, %s96
    $region4: #{tpu_custom_call.1} parent=1 // loop_header_branch
      %17 = sbr.rel (%p15) target = $region8
    $region5: #{tpu_custom_call.1} parent=1 // loop_body
      %s19 = ssub.s32 %s14, 1
      %s20 = ssub.s32 %s14, 2
      %s27 = sadd.s32 1, %s22
      %p28 = scmp.ge.s32.totalorder %s27, 1
      %s29 = scalar_select %p28, 0, %s27
      %s30 = sadd.s32 1, %s21
      %s31 = scalar_select %p28, %s30, %s21
      %p32 = scmp.ge.s32.totalorder %s31, 2
      %s33 = scalar_select %p32, 0, %s31
      %s34 = sadd.s32 %s21, %s22
      %s35 = sadd.s32 %s33, %s29
      %s36 = ssub.s32 %s34, %s35
      %p37 = scmp.eq.s32.totalorder %s36, 0
      %s39 = sadd.s32 %s38, 1
      %s40 = scalar_select %p37, %s38, %s39
      %p43 = pneg %p37
      %p44 = scmp.eq.s32.totalorder %s14, 1
      %p45 = por %p43, %p44
      %p46 = scmp.ne.s32.totalorder %s38, %s41
      %p47 = scmp.eq.s32.totalorder %s14, 0
      %p48 = por %p46, %p47
      %p49 = scmp.ne.s32.totalorder %s38, %s41
      %p50 = scmp.eq.s32.totalorder %s19, 1
      %p51 = por %p49, %p50
      %p52 = scmp.ne.s32.totalorder %s41, %s42
      %p53 = scmp.eq.s32.totalorder %s19, 0
      %p54 = por %p52, %p53
      %p55 = scmp.ne.s32.totalorder %s41, %s42
      %p56 = scmp.eq.s32.totalorder %s20, 1
      %p57 = por %p55, %p56
      %p59 = scmp.ne.s32.totalorder %s42, %s58
      %p60 = scmp.eq.s32.totalorder %s20, 0
      %p61 = por %p59, %p60
      %s62 = sadd.s32 %s21, %s22
      %s63 = sadd.s32 %s33, %s29
      %s64 = ssub.s32 %s62, %s63
      %p65 = scmp.eq.s32.totalorder %s64, 0
      %s67 = sadd.s32 %s66, 1
      %s68 = scalar_select %p65, %s66, %s67
      %p71 = pneg %p65
      %p72 = scmp.eq.s32.totalorder %s14, 1
      %p73 = por %p71, %p72
      %p74 = scmp.ne.s32.totalorder %s66, %s69
      %p75 = scmp.eq.s32.totalorder %s14, 0
      %p76 = por %p74, %p75
      %p77 = scmp.ne.s32.totalorder %s66, %s69
      %p78 = scmp.eq.s32.totalorder %s19, 1
      %p79 = por %p77, %p78
      %p80 = scmp.ne.s32.totalorder %s69, %s70
      %p81 = scmp.eq.s32.totalorder %s19, 0
      %p82 = por %p80, %p81
      %p83 = scmp.ne.s32.totalorder %s69, %s70
      %p84 = scmp.eq.s32.totalorder %s20, 1
      %p85 = por %p83, %p84
      %p87 = scmp.ne.s32.totalorder %s70, %s86
      %p88 = scmp.eq.s32.totalorder %s20, 0
      %p89 = por %p87, %p88
      %s90 = ssub.s32 %s21, %s33
      %p91 = scmp.eq.s32.totalorder %s90, 0
      %s93 = sadd.s32 %s92, 1
      %s94 = scalar_select %p91, %s92, %s93
      %p97 = pneg %p91
      %p98 = scmp.eq.s32.totalorder %s14, 1
      %p99 = por %p97, %p98
      %p100 = scmp.ne.s32.totalorder %s92, %s95
      %p101 = scmp.eq.s32.totalorder %s14, 0
      %p102 = por %p100, %p101
      %p103 = scmp.ne.s32.totalorder %s92, %s95
      %p104 = scmp.eq.s32.totalorder %s19, 1
      %p105 = por %p103, %p104
      %p106 = scmp.ne.s32.totalorder %s95, %s96
      %p107 = scmp.eq.s32.totalorder %s19, 0
      %p108 = por %p106, %p107
      %p109 = scmp.ne.s32.totalorder %s95, %s96
      %p110 = scmp.eq.s32.totalorder %s20, 1
      %p111 = por %p109, %p110
      %p113 = scmp.ne.s32.totalorder %s96, %s112
      %p114 = scmp.eq.s32.totalorder %s20, 0
      %p115 = por %p113, %p114
      %p116 = scmp.le.s32.totalorder 1, %s14
      %p117 = scmp.lt.s32.totalorder %s14, 3
      %p118 = pnand %p116, %p117
      %p119 = pneg %p118
      // Predicated region
      $region9: #{tpu_custom_call.1} parent=5 // pred_check
        _
      $region10: #{tpu_custom_call.1} parent=5 // pred_check_branch
        %121 = sbr.rel (%p118) target = $region12
      $region11: #{tpu_custom_call.1} parent=5 // pred_region
        %s122 = ssub.s32 %s14, 1
      $region12: #{tpu_custom_call.1} parent=5 // pred_fallthru
        _
      %p123 = scmp.lt.s32.totalorder %s14, 2
      // Predicated region
      $region13: #{tpu_custom_call.1} parent=5 // pred_check
        %p124 = pneg %p123
      $region14: #{tpu_custom_call.1} parent=5 // pred_check_branch
        %126 = sbr.rel (%p124) target = $region16
      $region15: #{tpu_custom_call.1} parent=5 // pred_region
        // Predicated region
        $region17: #{tpu_custom_call.1} parent=15 // pred_check
          %p127 = pneg %p48
        $region18: #{tpu_custom_call.1} parent=15 // pred_check_branch
          %129 = sbr.rel (%p127) target = $region20
        $region19: #{tpu_custom_call.1} parent=15 // pred_region
          %s130 = sand.u32 %s38, 1
          %s131 = scalar_lea.sflag [#allocation4], %s130
          %s132 = sand.u32 %s38, 1
          %s133 = smul.addr %s132, 8
          %s134 = scalar_lea.vmem [#allocation3], %s133
          %s135 = sadd.s32 %s21, %s22
          %s137 = ssub.s32 128, 128
          %138 = vsyncadd %s131, %s137
          %s139 = smul.addr %s135, 128
          %s140 = scalar_lea.hbm %s0, %s139
          %s142 = sshll.u32 %s134, 4
          %s143 = int_to_ptr.vmem [resolvable:$true] %s142
          %145 = dma.hbm_to_vmem [thread:$0]  %s140, 128, %s143, %s131
        $region20: #{tpu_custom_call.1} parent=15 // pred_fallthru
          _
        // Predicated region
        $region21: #{tpu_custom_call.1} parent=15 // pred_check
          %p146 = pneg %p76
        $region22: #{tpu_custom_call.1} parent=15 // pred_check_branch
          %148 = sbr.rel (%p146) target = $region24
        $region23: #{tpu_custom_call.1} parent=15 // pred_region
          %s149 = sand.u32 %s66, 1
          %s150 = scalar_lea.sflag [#allocation6], %s149
          %s151 = sand.u32 %s66, 1
          %s152 = smul.addr %s151, 8
          %s153 = scalar_lea.vmem [#allocation5], %s152
          %s154 = sadd.s32 %s21, %s22
          %s156 = ssub.s32 128, 128
          %157 = vsyncadd %s150, %s156
          %s158 = smul.addr %s154, 128
          %s159 = scalar_lea.hbm %s1, %s158
          %s161 = sshll.u32 %s153, 4
          %s162 = int_to_ptr.vmem [resolvable:$true] %s161
          %164 = dma.hbm_to_vmem [thread:$0]  %s159, 128, %s162, %s150
        $region24: #{tpu_custom_call.1} parent=15 // pred_fallthru
          _
      $region16: #{tpu_custom_call.1} parent=5 // pred_fallthru
        _
      %p165 = scmp.le.s32.totalorder 1, %s14
      %p166 = scmp.lt.s32.totalorder %s14, 3
      %p167 = pnand %p165, %p166
      %p168 = pneg %p167
      // Predicated region
      $region25: #{tpu_custom_call.1} parent=5 // pred_check
        _
      $region26: #{tpu_custom_call.1} parent=5 // pred_check_branch
        %170 = sbr.rel (%p167) target = $region28
      $region27: #{tpu_custom_call.1} parent=5 // pred_region
        %s171 = ssub.s32 %s14, 1
        %s172 = sand.u32 %s41, 1
        %s173 = scalar_lea.sflag [#allocation4], %s172
        %s174 = sand.u32 %s41, 1
        %s175 = smul.addr %s174, 8
        %s176 = scalar_lea.vmem [#allocation3], %s175
        // Predicated region
        $region29: #{tpu_custom_call.1} parent=27 // pred_check
          %p177 = pneg %p54
        $region30: #{tpu_custom_call.1} parent=27 // pred_check_branch
          %179 = sbr.rel (%p177) target = $region32
        $region31: #{tpu_custom_call.1} parent=27 // pred_region
          %180 = dma.done %s173, 128
        $region32: #{tpu_custom_call.1} parent=27 // pred_fallthru
          _
        %s181 = sand.u32 %s69, 1
        %s182 = scalar_lea.sflag [#allocation6], %s181
        %s183 = sand.u32 %s69, 1
        %s184 = smul.addr %s183, 8
        %s185 = scalar_lea.vmem [#allocation5], %s184
        // Predicated region
        $region33: #{tpu_custom_call.1} parent=27 // pred_check
          %p186 = pneg %p82
        $region34: #{tpu_custom_call.1} parent=27 // pred_check_branch
          %188 = sbr.rel (%p186) target = $region36
        $region35: #{tpu_custom_call.1} parent=27 // pred_region
          %189 = dma.done %s182, 128
        $region36: #{tpu_custom_call.1} parent=27 // pred_fallthru
          _
        %s190 = sand.u32 %s41, 1
        %s191 = scalar_lea.sflag [#allocation4], %s190
        %s192 = sand.u32 %s41, 1
        %s193 = smul.addr %s192, 8
        %s194 = scalar_lea.vmem [#allocation3], %s193
        %p195 = pneg %p54
        %p196 = pneg %p51
        %s197 = sand.u32 %s69, 1
        %s198 = scalar_lea.sflag [#allocation6], %s197
        %s199 = sand.u32 %s69, 1
        %s200 = smul.addr %s199, 8
        %s201 = scalar_lea.vmem [#allocation5], %s200
        %p202 = pneg %p82
        %p203 = pneg %p79
        %p204 = pneg %p108
        %p205 = pneg %p105
        %p206 = scmp.lt.s32.totalorder %s23, 1
        %s207 = scalar_select %p206, %s23, 1
        %s208 = smul.addr %s207, 4
        %s209 = scalar_lea.vmem %s2, %s208
        %s210 = sadd.s32 %s23, %s24
        %s211 = sadd.s32 %s23, %s24
        %p212 = scmp.lt.s32.totalorder %s23, 1
        %s213 = scalar_select %p212, %s23, 1
        %s214 = smul.addr %s213, 4
        %s215 = scalar_lea.vmem %s2, %s214
        %p216 = scmp.eq.s32.totalorder %s24, 0
        // Predicated region
        $region37: #{tpu_custom_call.1} parent=27 // pred_check
          %p217 = pneg %p216
        $region38: #{tpu_custom_call.1} parent=27 // pred_check_branch
          %219 = sbr.rel (%p217) target = $region40
        $region39: #{tpu_custom_call.1} parent=27 // pred_region
          %220 = vst [vmem:[#allocation2] sm:$0xff] 0.0
          %221 = vst [vmem:[#allocation2 + $0x8] sm:$0xff] 0.0
          %222 = vst [vmem:[#allocation2 + $0x10] sm:$0xff] 0.0
        $region40: #{tpu_custom_call.1} parent=27 // pred_fallthru
          _
        %v223 = vld [vmem:[%s176] sm:$0xff]
        %v224 = vxor.u32 %v223, 2147483648
        %v225 = vmul.f32 %v224, 1.442695
        %v226 = vpow.pop %v225
        %v227 = vadd.f32 %v226, 1.0
        %v228 = vrcp.pop %v227
        %v229 = vmul.f32 1.0, %v228
        %v230 = vld [vmem:[%s185] sm:$0xff]
        %v231 = vld [vmem:[#allocation2] sm:$0xff]
        %v232 = vmul.f32 %v229, %v230
        %v233 = vadd.f32 %v232, 0.0
        %v234 = vadd.f32 %v231, %v233
        %235 = vst [vmem:[#allocation2] sm:$0xff] %v234
        %s236 = scalar_lea.vmem [#allocation2], 8
        %v237 = vld [vmem:[%s236] sm:$0xff]
        %v238 = vmul.f32 %v230, %v230
        %v239 = vadd.f32 %v238, 0.0
        %v240 = vadd.f32 %v237, %v239
        %241 = vst [vmem:[%s236] sm:$0xff] %v240
        %s242 = scalar_lea.vmem [#allocation2], 16
        %v243 = vld [vmem:[%s242] sm:$0xff]
        %v244 = vmul.f32 %v229, %v229
        %v245 = vadd.f32 %v244, 0.0
        %v246 = vadd.f32 %v243, %v245
        %247 = vst [vmem:[%s242] sm:$0xff] %v246
        // Predicated region
        $region41: #{tpu_custom_call.1} parent=27 // pred_check
          %p248 = pneg %p216
        $region42: #{tpu_custom_call.1} parent=27 // pred_check_branch
          %250 = sbr.rel (%p248) target = $region44
        $region43: #{tpu_custom_call.1} parent=27 // pred_region
          %v251 = vld [vmem:[#allocation2] sm:$0xff]
          %v252 = vld [vmem:[#allocation2 + $0x8] sm:$0xff]
          %v253 = vld [vmem:[#allocation2 + $0x10] sm:$0xff]
          %v254 = vrot.slane %v251, 4
          %v255 = vadd.f32 %v251, %v254
          %v256 = vrot.slane %v255, 2
          %v257 = vadd.f32 %v255, %v256
          %v258 = vrot.slane %v257, 1
          %v259 = vadd.f32 %v257, %v258
          %v260 = vrot.slane %v252, 4
          %v261 = vadd.f32 %v252, %v260
          %v262 = vrot.slane %v261, 2
          %v263 = vadd.f32 %v261, %v262
          %v264 = vrot.slane %v263, 1
          %v265 = vadd.f32 %v263, %v264
          %v266 = vrot.slane %v253, 4
          %v267 = vadd.f32 %v253, %v266
          %v268 = vrot.slane %v267, 2
          %v269 = vadd.f32 %v267, %v268
          %v270 = vrot.slane %v269, 1
          %v271 = vadd.f32 %v269, %v270
          %vm275 = vcmask 1041409
          %v276 = vsel %vm275, %v265, %v259
          %vm277 = vcmask 1042434
          %v278 = vsel %vm277, %v271, %v276
          %280 = vst [vmem:[%s215] sm:$0x7] %v278
        $region44: #{tpu_custom_call.1} parent=27 // pred_fallthru
          _
        %p281 = scmp.lt.s32.totalorder %s23, 1
        %s282 = scalar_select %p281, %s23, 1
        %s283 = smul.addr %s282, 4
        %s284 = scalar_lea.vmem %s2, %s283
        // Predicated region
        $region45: #{tpu_custom_call.1} parent=27 // pred_check
          %p285 = pneg %p105
        $region46: #{tpu_custom_call.1} parent=27 // pred_check_branch
          %287 = sbr.rel (%p285) target = $region48
        $region47: #{tpu_custom_call.1} parent=27 // pred_region
          _
        $region48: #{tpu_custom_call.1} parent=27 // pred_fallthru
          _
      $region28: #{tpu_custom_call.1} parent=5 // pred_fallthru
        _
      %p288 = scmp.le.s32.totalorder 2, %s14
      // Predicated region
      $region49: #{tpu_custom_call.1} parent=5 // pred_check
        %p289 = pneg %p288
      $region50: #{tpu_custom_call.1} parent=5 // pred_check_branch
        %291 = sbr.rel (%p289) target = $region52
      $region51: #{tpu_custom_call.1} parent=5 // pred_region
        %s292 = ssub.s32 %s14, 2
        // Predicated region
        $region53: #{tpu_custom_call.1} parent=51 // pred_check
          %p293 = pneg %p111
        $region54: #{tpu_custom_call.1} parent=51 // pred_check_branch
          %295 = sbr.rel (%p293) target = $region56
        $region55: #{tpu_custom_call.1} parent=51 // pred_region
          %p296 = scmp.lt.s32.totalorder %s25, 1
          %s297 = scalar_select %p296, %s25, 1
          %s298 = smul.addr %s297, 4
          %s299 = scalar_lea.vmem %s2, %s298
        $region56: #{tpu_custom_call.1} parent=51 // pred_fallthru
          _
      $region52: #{tpu_custom_call.1} parent=5 // pred_fallthru
        _
    $region6: #{tpu_custom_call.1} parent=1 // loop_footer
      %s18 = sadd.s32 1, %s14
    $region7: #{tpu_custom_call.1} parent=1 // loop_footer_branch
      %13 = sbr.rel target = $region3
    $region8: #{tpu_custom_call.1} parent=1 // loop_exit
      _
    %300 = vsyncpa [#allocation4], 1
    %s301 = scalar_lea.sflag [#allocation4], 1
    %302 = vsyncpa %s301, 1
    %303 = vsyncpa [#allocation6], 1
    %s304 = scalar_lea.sflag [#allocation6], 1
    %305 = vsyncpa %s304, 1

</llo_original>
